<compile_context>
chip_gen: v5e
topology: v5e:2x2
jax: 0.10.0
libtpu: 0.0.40
codegen_flags: <defaults>
</compile_context>

<pallas_src>
import jax
import jax.numpy as jnp
from jax.experimental import pallas as pl
from jax.experimental.pallas import tpu as pltpu


def _grouped_linear_kernel(x_ref, w_ref, b_ref, o_ref):
    # x_ref: (TN, GB*in_g)            lane-dense activation slab (GB fused groups)
    # w_ref: (1, GB*in_g, GB*out_g)   block-diagonal fused weight
    # b_ref: (1, 1, GB*out_g)
    # o_ref: (TN, GB*out_g)           lane-dense output slab
    acc = jnp.dot(x_ref[...], w_ref[0], preferred_element_type=jnp.float32)
    acc = acc + b_ref[0].astype(jnp.float32)
    o_ref[...] = acc.astype(o_ref.dtype)


def _pick_group_fuse(groups, in_g, out_g):
    """Smallest divisor GB of `groups` making both fused dims 128-aligned.

    Falls back to GB = groups (block dims == full array dims, always legal)."""
    for gb in range(1, groups + 1):
        if groups % gb:
            continue
        if (gb * in_g) % 128 == 0 and (gb * out_g) % 128 == 0:
            return gb
    return groups


def _pick_row_tile(n, kf, nf, itemsize, budget_bytes=16 * 1024 * 1024):
    """Largest multiple-of-8 row tile whose double-buffered working set fits
    the (conservative, cross-generation safe) VMEM budget."""
    if n <= 8 or n % 8 != 0:
        # Block second-to-last dim must be a multiple of 8 or the full dim.
        return n
    fixed = 2 * itemsize * (kf * nf + nf)     # double-buffered weight + bias
    per_row = 2 * itemsize * (kf + nf)        # double-buffered x tile + y tile
    tn = (budget_bytes - fixed) // max(per_row, 1)
    tn = max(8, min(int(tn), n, 1024))
    return (tn // 8) * 8


def grouped_linear(x, weight, bias, groups, *, compute_dtype=None):
    """Grouped linear (Conv1d k=1, groups>1) forward.

    x:      (N, in_features)
    weight: (out_features, in_features // groups)  (Conv1d weight, kernel dim squeezed)
    bias:   (out_features,)
    """
    n, in_features = x.shape
    out_features = weight.shape[0]
    in_g = in_features // groups
    out_g = out_features // groups
    out_dtype = x.dtype

    if compute_dtype is not None:   # e.g. jnp.bfloat16 on v6e / v7x
        x = x.astype(compute_dtype)
        weight = weight.astype(compute_dtype)

    gb = _pick_group_fuse(groups, in_g, out_g)
    nb = groups // gb               # number of fused-group blocks
    kf = gb * in_g                  # fused K  (x slab width)
    nf = gb * out_g                 # fused N  (y slab width)

    # One-time weight re-pack (parameters only; activations untouched):
    # per-group (out_g, in_g) -> transposed (in_g, out_g), placed block-
    # diagonally so the kernel runs one dense, lane-aligned matmul per block.
    wt = jnp.transpose(weight.reshape(nb, gb, out_g, in_g), (0, 1, 3, 2))
    eye = jnp.eye(gb, dtype=weight.dtype)
    w_fused = jnp.einsum("bgio,gh->bgiho", wt, eye).reshape(nb, kf, nf)
    b_fused = bias.reshape(nb, 1, nf)

    itemsize = jnp.dtype(x.dtype).itemsize
    tn = _pick_row_tile(n, kf, nf, itemsize)
    n_tiles = pl.cdiv(n, tn)

    # Grid: group-block axis first, row-tile axis last (fastest varying), so
    # consecutive steps keep the same weight/bias block index and skip those
    # DMAs entirely.  Both axes are independent -> "parallel" (megacore/2-TC).
    y = pl.pallas_call(
        _grouped_linear_kernel,
        out_shape=jax.ShapeDtypeStruct((n, out_features), out_dtype),
        grid_spec=pltpu.PrefetchScalarGridSpec(
            num_scalar_prefetch=0,
            grid=(nb, n_tiles),
            in_specs=[
                pl.BlockSpec((tn, kf), lambda b, i: (i, b)),        # x slab
                pl.BlockSpec((1, kf, nf), lambda b, i: (b, 0, 0)),  # fused W
                pl.BlockSpec((1, 1, nf), lambda b, i: (b, 0, 0)),   # bias
            ],
            out_specs=pl.BlockSpec((tn, nf), lambda b, i: (i, b)),  # y slab
        ),
        compiler_params=pltpu.CompilerParams(
            dimension_semantics=("parallel", "parallel"),
        ),
    )(x, w_fused, b_fused)
    # TODO(synk): add K-tiling (3rd 'arbitrary' grid axis over kf with an f32
    # VMEM accumulator) for very large per-group in_features.
    return y


if __name__ == "__main__":
    # Module config (groups must be > 1 per the PyTorch assert).
    in_features = 32
    out_features = 64
    groups = 4
    batch = 8

    key = jax.random.PRNGKey(0)
    kx, kw, kb = jax.random.split(key, 3)

    in_g = in_features // groups
    out_g = out_features // groups
    bound = 1.0 / (in_g ** 0.5)  # same scale as PyTorch's uniform init bound
    weight = jax.random.uniform(
        kw, (out_features, in_g), jnp.float32, minval=-bound, maxval=bound
    )
    bias = jax.random.uniform(
        kb, (out_features,), jnp.float32, minval=-bound, maxval=bound
    )
    x = jax.random.normal(kx, (batch, in_features), jnp.float32)

    y = grouped_linear(x, weight, bias, groups)
    y = jax.block_until_ready(y)

    # Pure-JAX reference: block-diagonal grouped matmul (Conv1d k=1, groups).
    xg = x.reshape(batch, groups, in_g)
    wg = weight.reshape(groups, out_g, in_g)
    y_ref = (
        jnp.einsum("ngi,goi->ngo", xg, wg) + bias.reshape(groups, out_g)
    ).reshape(batch, out_features)

    assert y.shape == (batch, out_features)
    assert jnp.allclose(y, y_ref, atol=1e-5, rtol=1e-5)
    print("KERNEL_OK")
</pallas_src>

<mosaic_0001>
module attributes {stable_mosaic.version = 11 : i64} {
  func.func @_grouped_linear_kernel(%arg0: i32, %arg1: i32, %arg2: memref<8x32xf32, #tpu.memory_space<vmem>>, %arg3: memref<1x32x64xf32, #tpu.memory_space<vmem>>, %arg4: memref<1x1x64xf32, #tpu.memory_space<vmem>>, %arg5: memref<8x64xf32, #tpu.memory_space<vmem>>) attributes {dimension_semantics = [#tpu.dimension_semantics<parallel>, #tpu.dimension_semantics<parallel>], iteration_bounds = array<i64: 1, 1>, scalar_prefetch = 0 : i64, scratch_operands = 0 : i64, tpu.core_type = #tpu.core_type<tc>, window_params = [{transform_indices = @transform_0, window_bounds = array<i64: 8, 32>}, {transform_indices = @transform_1, window_bounds = array<i64: 1, 32, 64>}, {transform_indices = @transform_2, window_bounds = array<i64: 1, 1, 64>}, {transform_indices = @transform_3, window_bounds = array<i64: 8, 64>}]} {
    %c0 = arith.constant 0 : index
    %c0_0 = arith.constant 0 : index
    %0 = vector.load %arg2[%c0, %c0_0] : memref<8x32xf32, #tpu.memory_space<vmem>>, vector<8x32xf32>
    %c0_1 = arith.constant 0 : index
    %c0_2 = arith.constant 0 : index
    %c0_3 = arith.constant 0 : index
    %1 = vector.load %arg3[%c0_1, %c0_2, %c0_3] : memref<1x32x64xf32, #tpu.memory_space<vmem>>, vector<1x32x64xf32>
    %2 = vector.shape_cast %1 : vector<1x32x64xf32> to vector<32x64xf32>
    %cst = arith.constant dense<0.000000e+00> : vector<8x64xf32>
    %3 = tpu.matmul %0, %2, %cst {dimension_numbers = #tpu.dot_dimension_numbers<[1], [0], [0], [1], [0, 0, 1, 1], [], []>} : vector<8x32xf32>, vector<32x64xf32>, vector<8x64xf32> -> vector<8x64xf32>
    %c0_4 = arith.constant 0 : index
    %c0_5 = arith.constant 0 : index
    %c0_6 = arith.constant 0 : index
    %4 = vector.load %arg4[%c0_4, %c0_5, %c0_6] : memref<1x1x64xf32, #tpu.memory_space<vmem>>, vector<1x1x64xf32>
    %5 = vector.shape_cast %4 : vector<1x1x64xf32> to vector<1x64xf32>
    %6 = vector.broadcast %5 : vector<1x64xf32> to vector<8x64xf32>
    %7 = arith.addf %3, %6 : vector<8x64xf32>
    %c0_7 = arith.constant 0 : index
    %c0_8 = arith.constant 0 : index
    %8 = vector.load %arg5[%c0_7, %c0_8] : memref<8x64xf32, #tpu.memory_space<vmem>>, vector<8x64xf32>
    tpu.vector_store %arg5[%c0_7, %c0_8], %7 {strides = array<i32>} : memref<8x64xf32, #tpu.memory_space<vmem>>, vector<8x64xf32>,
    return
  }
  func.func @transform_0(%arg0: i32, %arg1: i32) -> (i32, i32) {
    %c0_i32 = arith.constant 0 : i32
    return %arg1, %arg0 : i32, i32
  }
  func.func @transform_1(%arg0: i32, %arg1: i32) -> (i32, i32, i32) {
    %c0_i32 = arith.constant 0 : i32
    %c0_i32_0 = arith.constant 0 : i32
    %c0_i32_1 = arith.constant 0 : i32
    return %arg0, %c0_i32, %c0_i32_0 : i32, i32, i32
  }
  func.func @transform_2(%arg0: i32, %arg1: i32) -> (i32, i32, i32) {
    %c0_i32 = arith.constant 0 : i32
    %c0_i32_0 = arith.constant 0 : i32
    %c0_i32_1 = arith.constant 0 : i32
    return %arg0, %c0_i32, %c0_i32_0 : i32, i32, i32
  }
  func.func @transform_3(%arg0: i32, %arg1: i32) -> (i32, i32) {
    %c0_i32 = arith.constant 0 : i32
    return %arg1, %arg0 : i32, i32
  }
}

</mosaic_0001>

<llo_original>
// kernel: tpu_custom_call.1
$region0: #{tpu_custom_call.1}
  #allocation0 [shape = 'u32[]', space=smem, size = 0x4, offset = 0x4, fixed_abs, tag = 'smem constant byte address 0x4 - core index']
  #allocation1 [shape = 'u32[72,128]{1,0:T(1,128)}', space=vmem, size = 0x9000, scoped, tag = 'internal scratch']
  %s0 = inlined_call_operand.hbm [shape: f32[8,32], index: 0, kind: input, shape index: {}]
  %s1 = inlined_call_operand.hbm [shape: f32[1,32,64], index: 1, kind: input, shape index: {}]
  %s2 = inlined_call_operand.vmem [shape: f32[1,1,64], index: 2, kind: input, shape index: {}]
  %s3 = inlined_call_operand.hbm [shape: f32[8,64], index: 3, kind: output, shape index: {}]
  %s4 = sld [smem:[#allocation0]]
  $region30: #{tpu_custom_call.1} parent=0
    _
  %s6 = ssub.s32 1, %s4
  %s7 = scalar_select 0, %s6, %s4
  $region1: #{tpu_custom_call.1} parent=0
    #allocation2 [shape = 'u8[4096]{0}', space=vmem, size = 0x1000, scoped, tag = 'input window, operand 0, single buffered']
    #allocation3 [shape = 's32[1]{0}', space=sflag, size = 0x4, scoped, tag = 'scoped memory for tpu_custom_call.1']
    #allocation4 [shape = 's32[1]{0}', space=sflag, size = 0x4, scoped, tag = 'scoped memory for tpu_custom_call.1']
    #allocation5 [shape = 'u8[16384]{0}', space=vmem, size = 0x4000, scoped, tag = 'input window, operand 1, single buffered']
    #allocation6 [shape = 's32[1]{0}', space=sflag, size = 0x4, scoped, tag = 'scoped memory for tpu_custom_call.1']
    #allocation7 [shape = 'u8[4096]{0}', space=vmem, size = 0x1000, scoped, tag = 'output window, operand 0, single buffered']
    %8 = vsyncpa [#allocation3], 0
    %9 = vsyncpa [#allocation6], 0
    %10 = vsyncpa [#allocation4], 0
    // Predicated region
    $region2: #{tpu_custom_call.1} parent=1 // pred_check
      _
    $region3: #{tpu_custom_call.1} parent=1 // pred_check_branch
      %12 = sbr.rel (0) target = $region5
    $region4: #{tpu_custom_call.1} parent=1 // pred_region
      %14 = vsyncadd [#allocation3], 0
      %s16 = sshll.u32 %s0, 4
      %s17 = int_to_ptr.hbm [resolvable:$true] %s16
      %s18 = sshll.u32 [#allocation2], 4
      %s19 = int_to_ptr.vmem [resolvable:$true] %s18
      %21 = dma.hbm_to_vmem [thread:$0]  %s17, 128, %s19, [#allocation3]
    $region5: #{tpu_custom_call.1} parent=1 // pred_fallthru
      _
    // Predicated region
    $region6: #{tpu_custom_call.1} parent=1 // pred_check
      _
    $region7: #{tpu_custom_call.1} parent=1 // pred_check_branch
      %23 = sbr.rel (0) target = $region9
    $region8: #{tpu_custom_call.1} parent=1 // pred_region
      %25 = vsyncadd [#allocation6], 0
      %s26 = sshll.u32 %s1, 4
      %s27 = int_to_ptr.hbm [resolvable:$true] %s26
      %s28 = sshll.u32 [#allocation5], 4
      %s29 = int_to_ptr.vmem [resolvable:$true] %s28
      %34 = dma.hbm_to_vmem [thread:$0]  %s27, 512, %s29, [#allocation6], 128, 128, 8
    $region9: #{tpu_custom_call.1} parent=1 // pred_fallthru
      _
    // Predicated region
    $region10: #{tpu_custom_call.1} parent=1 // pred_check
      _
    $region11: #{tpu_custom_call.1} parent=1 // pred_check_branch
      %36 = sbr.rel (0) target = $region13
    $region12: #{tpu_custom_call.1} parent=1 // pred_region
      _
    $region13: #{tpu_custom_call.1} parent=1 // pred_fallthru
      _
    // Predicated region
    $region14: #{tpu_custom_call.1} parent=1 // pred_check
      _
    $region15: #{tpu_custom_call.1} parent=1 // pred_check_branch
      %38 = sbr.rel (0) target = $region17
    $region16: #{tpu_custom_call.1} parent=1 // pred_region
      %40 = dma.done [#allocation3], 128
    $region17: #{tpu_custom_call.1} parent=1 // pred_fallthru
      _
    // Predicated region
    $region18: #{tpu_custom_call.1} parent=1 // pred_check
      _
    $region19: #{tpu_custom_call.1} parent=1 // pred_check_branch
      %42 = sbr.rel (0) target = $region21
    $region20: #{tpu_custom_call.1} parent=1 // pred_region
      %44 = dma.done [#allocation6], 512
    $region21: #{tpu_custom_call.1} parent=1 // pred_fallthru
      _
    %v45 = vld [vmem:[#allocation2] sm:$0xff]
    %v46 = vld [vmem:[#allocation5] sm:$0xff]
    %v47 = vld [vmem:[#allocation5 + $0x8] sm:$0xff]
    %v48 = vld [vmem:[#allocation5 + $0x10] sm:$0xff]
    %v49 = vld [vmem:[#allocation5 + $0x18] sm:$0xff]
    %v50 = vld [vmem:[%s2] sm:$0x1]
    %v52 = vperm.slane %v50, 0
    %vm54 = vcmask 261120
    %v56 = vsel %vm54, %v45, 0
    %58 = vmatpush.msra.mxu0 0.0
    %59 = vmatpush.msra.mxu0 0.0
    %60 = vmatpush.msra.mxu0 0.0
    %61 = vmatpush.msra.mxu0 0.0
    %62 = vmatpush.msra.mxu0 0.0
    %63 = vmatpush.msra.mxu0 0.0
    %64 = vmatpush.msra.mxu0 0.0
    %65 = vmatpush.msra.mxu0 0.0
    %66 = vmatpush.msra.mxu0 0.0
    %67 = vmatpush.msra.mxu0 0.0
    %68 = vmatpush.msra.mxu0 0.0
    %69 = vmatpush.msra.mxu0 0.0
    %70 = vmatpush.msra.mxu0 %v49
    %71 = vmatpush.msra.mxu0 %v48
    %72 = vmatpush.msra.mxu0 %v47
    %73 = vmatpush.msra.mxu0 %v46
    %74 = vmatmul.f32.gmra.mxu0 %v56
    %v75 = vpop.f32.mrf.mxu0
    %v76 = vadd.f32 %v52, %v75
    %77 = vdwg.mxu0
    %vm78 = vcmask 523264
    %79 = vst.msk [vmem:[#allocation7] sm:$0xff] %vm78, %v76
    // Predicated region
    $region22: #{tpu_custom_call.1} parent=1 // pred_check
      _
    $region23: #{tpu_custom_call.1} parent=1 // pred_check_branch
      %81 = sbr.rel (0) target = $region25
    $region24: #{tpu_custom_call.1} parent=1 // pred_region
      %83 = vsyncadd [#allocation4], 0
      %s85 = sshll.u32 [#allocation7], 4
      %s86 = int_to_ptr.vmem [resolvable:$true] %s85
      %s87 = sshll.u32 %s3, 4
      %s88 = int_to_ptr.hbm [resolvable:$true] %s87
      %90 = dma.vmem_to_hbm [thread:$0]  %s86, 128, %s88, [#allocation4]
    $region25: #{tpu_custom_call.1} parent=1 // pred_fallthru
      _
    // Predicated region
    $region26: #{tpu_custom_call.1} parent=1 // pred_check
      _
    $region27: #{tpu_custom_call.1} parent=1 // pred_check_branch
      %92 = sbr.rel (0) target = $region29
    $region28: #{tpu_custom_call.1} parent=1 // pred_region
      %94 = dma.done [#allocation4], 128
    $region29: #{tpu_custom_call.1} parent=1 // pred_fallthru
      _
    %95 = vsyncpa [#allocation3], 1
    %96 = vsyncpa [#allocation6], 1
    %97 = vsyncpa [#allocation4], 1

</llo_original>
